<compile_context>
chip_gen: v6e
topology: v6e:2x2x1
jax: 0.10.0
libtpu: 0.0.40
codegen_flags: <defaults>
</compile_context>

<pallas_src>
import jax
import jax.numpy as jnp
from jax import lax
from jax.experimental import pallas as pl
from jax.experimental.pallas import tpu as pltpu


def fc_kernel(x_ref, w_ref, b_ref, o_ref):
    # x_ref: (TM, K), w_ref: (K, N), b_ref: (1, N) -> o_ref: (TM, N)
    acc = lax.dot_general(
        x_ref[...],
        w_ref[...],
        dimension_numbers=(((1,), (0,)), ((), ())),
        preferred_element_type=jnp.float32,
    )
    o_ref[...] = (acc + b_ref[...]).astype(o_ref.dtype)


def _round_up(a, b):
    return ((a + b - 1) // b) * b


def fc_forward(x, weight, bias, *, out_dtype=None, min_pallas_rows=256):
    """x: (M, 25), weight: (128, 25, 1, 1), bias: (128,) -> (M, 128).

    out_dtype: output dtype (default: x.dtype; pass jnp.bfloat16 to halve the
               dominant HBM writeback if downstream math tolerates it).
    min_pallas_rows: below this batch size, compute in plain JAX (launch
               overhead of a custom call dominates tiny problems).
    """
    M, K = x.shape
    N = weight.shape[0]
    out_dtype = x.dtype if out_dtype is None else out_dtype

    # Weight in MXU feed order: (K, N).  One-time ~13 KB transpose in the
    # wrapper, avoids a per-grid-step relayout inside the kernel body.
    w_kn = weight.reshape(N, K).T  # (25, 128)
    b2d = bias.reshape(1, N)       # (1, 128)

    # Small-M fast path: plain JAX (fuses with neighbors, no launch overhead).
    if M < min_pallas_rows:
        return (
            lax.dot_general(
                x, w_kn,
                dimension_numbers=(((1,), (0,)), ((), ())),
                preferred_element_type=jnp.float32,
            )
            + b2d
        ).astype(out_dtype)

    # Batch tiling:
    #  - M < 1024:     single full block (always a legal block shape).
    #  - M >= 1024:    at least 2 grid steps (v7x megacore), tiles <= 2048 rows
    #                  (multiple of 8 for f32 sublanes), ~1 MiB DMAs.
    if M < 1024:
        TM = M
    else:
        TM = min(2048, _round_up(pl.cdiv(M, 2), 8))
    grid = (pl.cdiv(M, TM),)

    cost = pl.CostEstimate(
        flops=2 * M * K * N,
        transcendentals=0,
        bytes_accessed=4 * (M * K + N * K + N) + jnp.dtype(out_dtype).itemsize * M * N,
    )

    out = pl.pallas_call(
        fc_kernel,
        out_shape=jax.ShapeDtypeStruct((M, N), out_dtype),
        grid=grid,
        in_specs=[
            pl.BlockSpec((TM, K), lambda i: (i, 0)),   # x tile streams with i
            pl.BlockSpec((K, N), lambda i: (0, 0)),    # weight resident (K,N)
            pl.BlockSpec((1, N), lambda i: (0, 0)),    # bias resident
        ],
        out_specs=pl.BlockSpec((TM, N), lambda i: (i, 0)),
        compiler_params=pltpu.CompilerParams(
            dimension_semantics=("parallel",),
        ),
        cost_estimate=cost,
    )(x, w_kn, b2d)
    return out


if __name__ == "__main__":
    key = jax.random.PRNGKey(0)
    kx, kw, kb = jax.random.split(key, 3)

    M, IN_FEATURES, OUT_FEATURES = 16, 25, 128

    x = jax.random.normal(kx, (M, IN_FEATURES), dtype=jnp.float32)
    weight = jax.random.normal(
        kw, (OUT_FEATURES, IN_FEATURES, 1, 1), dtype=jnp.float32
    )
    bias = jax.random.normal(kb, (OUT_FEATURES,), dtype=jnp.float32)

    # Force the Pallas path in the demo (min_pallas_rows=0) so the kernel
    # itself is compiled and executed even at this tiny batch size.
    out = fc_forward(x, weight, bias, min_pallas_rows=0)
    out = jax.block_until_ready(out)

    # Reference check in plain JAX.
    ref = x @ weight.reshape(OUT_FEATURES, IN_FEATURES).T + bias
    assert out.shape == (M, OUT_FEATURES)
    assert jnp.allclose(out, ref, atol=1e-4, rtol=1e-4)

    print("KERNEL_OK")
</pallas_src>

<mosaic_0001>
module attributes {stable_mosaic.version = 11 : i64} {
  func.func @fc_kernel(%arg0: i32, %arg1: memref<16x25xf32, #tpu.memory_space<vmem>>, %arg2: memref<25x128xf32, #tpu.memory_space<vmem>>, %arg3: memref<1x128xf32, #tpu.memory_space<vmem>>, %arg4: memref<16x128xf32, #tpu.memory_space<vmem>>) attributes {dimension_semantics = [#tpu.dimension_semantics<parallel>], iteration_bounds = array<i64: 1>, scalar_prefetch = 0 : i64, scratch_operands = 0 : i64, tpu.core_type = #tpu.core_type<tc>, window_params = [{transform_indices = @transform_0, window_bounds = array<i64: 16, 25>}, {pipeline_mode = #tpu.pipeline_mode<synchronous>, transform_indices = @transform_1, window_bounds = array<i64: 25, 128>}, {pipeline_mode = #tpu.pipeline_mode<synchronous>, transform_indices = @transform_2, window_bounds = array<i64: 1, 128>}, {transform_indices = @transform_3, window_bounds = array<i64: 16, 128>}]} {
    %c0 = arith.constant 0 : index
    %c0_0 = arith.constant 0 : index
    %0 = vector.load %arg1[%c0, %c0_0] : memref<16x25xf32, #tpu.memory_space<vmem>>, vector<16x25xf32>
    %c0_1 = arith.constant 0 : index
    %c0_2 = arith.constant 0 : index
    %1 = vector.load %arg2[%c0_1, %c0_2] : memref<25x128xf32, #tpu.memory_space<vmem>>, vector<25x128xf32>
    %cst = arith.constant dense<0.000000e+00> : vector<16x128xf32>
    %2 = tpu.matmul %0, %1, %cst {dimension_numbers = #tpu.dot_dimension_numbers<[1], [0], [0], [1], [0, 0, 1, 1], [], []>} : vector<16x25xf32>, vector<25x128xf32>, vector<16x128xf32> -> vector<16x128xf32>
    %c0_3 = arith.constant 0 : index
    %c0_4 = arith.constant 0 : index
    %3 = vector.load %arg3[%c0_3, %c0_4] : memref<1x128xf32, #tpu.memory_space<vmem>>, vector<1x128xf32>
    %4 = vector.broadcast %3 : vector<1x128xf32> to vector<16x128xf32>
    %5 = arith.addf %2, %4 : vector<16x128xf32>
    %c0_5 = arith.constant 0 : index
    %c0_6 = arith.constant 0 : index
    %6 = vector.load %arg4[%c0_5, %c0_6] : memref<16x128xf32, #tpu.memory_space<vmem>>, vector<16x128xf32>
    tpu.vector_store %arg4[%c0_5, %c0_6], %5 {strides = array<i32>} : memref<16x128xf32, #tpu.memory_space<vmem>>, vector<16x128xf32>,
    return
  }
  func.func @transform_0(%arg0: i32) -> (i32, i32) {
    %c0_i32 = arith.constant 0 : i32
    %c0_i32_0 = arith.constant 0 : i32
    return %arg0, %c0_i32 : i32, i32
  }
  func.func @transform_1(%arg0: i32) -> (i32, i32) {
    %c0_i32 = arith.constant 0 : i32
    %c0_i32_0 = arith.constant 0 : i32
    %c0_i32_1 = arith.constant 0 : i32
    return %c0_i32, %c0_i32_0 : i32, i32
  }
  func.func @transform_2(%arg0: i32) -> (i32, i32) {
    %c0_i32 = arith.constant 0 : i32
    %c0_i32_0 = arith.constant 0 : i32
    %c0_i32_1 = arith.constant 0 : i32
    return %c0_i32, %c0_i32_0 : i32, i32
  }
  func.func @transform_3(%arg0: i32) -> (i32, i32) {
    %c0_i32 = arith.constant 0 : i32
    %c0_i32_0 = arith.constant 0 : i32
    return %arg0, %c0_i32 : i32, i32
  }
}

</mosaic_0001>

<llo_original>
// kernel: tpu_custom_call.1
$region0: #{tpu_custom_call.1}
  #allocation0 [shape = 'u32[]', space=smem, size = 0x4, offset = 0x4, fixed_abs, tag = 'smem constant byte address 0x4 - core index']
  #allocation1 [shape = 'u32[144,128]{1,0:T(1,128)}', space=vmem, size = 0x12000, scoped, tag = 'internal scratch']
  %s0 = inlined_call_operand.hbm [shape: f32[16,25], index: 0, kind: input, shape index: {}]
  %s1 = inlined_call_operand.hbm [shape: f32[25,128], index: 1, kind: input, shape index: {}]
  %s2 = inlined_call_operand.vmem [shape: f32[1,128], index: 2, kind: input, shape index: {}]
  %s3 = inlined_call_operand.hbm [shape: f32[16,128], index: 3, kind: output, shape index: {}]
  %s4 = sld [smem:[#allocation0]]
  $region30: #{tpu_custom_call.1} parent=0
    _
  %s6 = ssub.s32 1, %s4
  %s7 = scalar_select 0, %s6, %s4
  $region1: #{tpu_custom_call.1} parent=0
    #allocation2 [shape = 'u8[8192]{0}', space=vmem, size = 0x2000, scoped, tag = 'input window, operand 0, single buffered']
    #allocation3 [shape = 's32[1]{0}', space=sflag, size = 0x4, scoped, tag = 'scoped memory for tpu_custom_call.1']
    #allocation4 [shape = 's32[1]{0}', space=sflag, size = 0x4, scoped, tag = 'scoped memory for tpu_custom_call.1']
    #allocation5 [shape = 'u8[16384]{0}', space=vmem, size = 0x4000, scoped, tag = 'input window, operand 1, single buffered']
    #allocation6 [shape = 's32[1]{0}', space=sflag, size = 0x4, scoped, tag = 'scoped memory for tpu_custom_call.1']
    #allocation7 [shape = 'u8[8192]{0}', space=vmem, size = 0x2000, scoped, tag = 'output window, operand 0, single buffered']
    %8 = vsyncpa [#allocation3], 0
    %9 = vsyncpa [#allocation6], 0
    %10 = vsyncpa [#allocation4], 0
    // Predicated region
    $region2: #{tpu_custom_call.1} parent=1 // pred_check
      _
    $region3: #{tpu_custom_call.1} parent=1 // pred_check_branch
      %12 = sbr.rel (0) target = $region5
    $region4: #{tpu_custom_call.1} parent=1 // pred_region
      %s14 = ssub.s32 256, 256
      %15 = vsyncadd [#allocation3], %s14
      %s16 = sshll.u32 [#allocation2], 4
      %s17 = int_to_ptr.vmem [resolvable:$true] %s16
      %22 = dma.hbm_to_vmem [thread:$0]  %s0, 256, %s17, [#allocation3], 128, 128, 8
    $region5: #{tpu_custom_call.1} parent=1 // pred_fallthru
      _
    // Predicated region
    $region6: #{tpu_custom_call.1} parent=1 // pred_check
      _
    $region7: #{tpu_custom_call.1} parent=1 // pred_check_branch
      %24 = sbr.rel (0) target = $region9
    $region8: #{tpu_custom_call.1} parent=1 // pred_region
      %s26 = ssub.s32 512, 512
      %27 = vsyncadd [#allocation6], %s26
      %s28 = sshll.u32 [#allocation5], 4
      %s29 = int_to_ptr.vmem [resolvable:$true] %s28
      %34 = dma.hbm_to_vmem [thread:$0]  %s1, 512, %s29, [#allocation6], 128, 128, 8
    $region9: #{tpu_custom_call.1} parent=1 // pred_fallthru
      _
    // Predicated region
    $region10: #{tpu_custom_call.1} parent=1 // pred_check
      _
    $region11: #{tpu_custom_call.1} parent=1 // pred_check_branch
      %36 = sbr.rel (0) target = $region13
    $region12: #{tpu_custom_call.1} parent=1 // pred_region
      _
    $region13: #{tpu_custom_call.1} parent=1 // pred_fallthru
      _
    // Predicated region
    $region14: #{tpu_custom_call.1} parent=1 // pred_check
      _
    $region15: #{tpu_custom_call.1} parent=1 // pred_check_branch
      %38 = sbr.rel (0) target = $region17
    $region16: #{tpu_custom_call.1} parent=1 // pred_region
      %39 = dma.done [#allocation3], 256
    $region17: #{tpu_custom_call.1} parent=1 // pred_fallthru
      _
    // Predicated region
    $region18: #{tpu_custom_call.1} parent=1 // pred_check
      _
    $region19: #{tpu_custom_call.1} parent=1 // pred_check_branch
      %41 = sbr.rel (0) target = $region21
    $region20: #{tpu_custom_call.1} parent=1 // pred_region
      %42 = dma.done [#allocation6], 512
    $region21: #{tpu_custom_call.1} parent=1 // pred_fallthru
      _
    %v43 = vld [vmem:[#allocation2] sm:$0xff]
    %v44 = vld [vmem:[#allocation2 + $0x8] sm:$0xff]
    %v45 = vld [vmem:[#allocation5] sm:$0xff]
    %v46 = vld [vmem:[#allocation5 + $0x8] sm:$0xff]
    %v47 = vld [vmem:[#allocation5 + $0x10] sm:$0xff]
    %v48 = vld [vmem:[#allocation5 + $0x18] sm:$0x1]
    %v49 = vld [vmem:[%s2] sm:$0x1]
    %v51 = vlaneseq
    %v52 = vshrl.u32 %v51, 7
    %v53 = vsub.s32 0, %v52
    %v54 = vrot.slane %v49, %v53
    %vm56 = vcmask 203776
    %v58 = vsel %vm56, %v43, 0
    %v61 = vsel %vm56, %v44, 0
    %vm63 = vcmask 1040384
    %v65 = vsel %vm63, %v48, 0
    %67 = vmatprep.subr.mxu0 0.0
    %68 = vmatpush1.msra.mxu0 0.0
    %69 = vmatprep.subr.mxu0 0.0
    %70 = vmatpush1.msra.mxu0 0.0
    %71 = vmatprep.subr.mxu0 0.0
    %72 = vmatpush1.msra.mxu0 0.0
    %73 = vmatprep.subr.mxu0 0.0
    %74 = vmatpush1.msra.mxu0 0.0
    %75 = vmatprep.subr.mxu0 0.0
    %76 = vmatpush1.msra.mxu0 0.0
    %77 = vmatprep.subr.mxu0 0.0
    %78 = vmatpush1.msra.mxu0 0.0
    %79 = vmatprep.subr.mxu0 0.0
    %80 = vmatpush1.msra.mxu0 0.0
    %81 = vmatprep.subr.mxu0 0.0
    %82 = vmatpush1.msra.mxu0 0.0
    %83 = vmatprep.subr.mxu0 0.0
    %84 = vmatpush1.msra.mxu0 0.0
    %85 = vmatprep.subr.mxu0 0.0
    %86 = vmatpush1.msra.mxu0 0.0
    %87 = vmatprep.subr.mxu0 0.0
    %88 = vmatpush1.msra.mxu0 0.0
    %89 = vmatprep.subr.mxu0 0.0
    %90 = vmatpush1.msra.mxu0 0.0
    %91 = vmatprep.subr.mxu0 0.0
    %92 = vmatpush1.msra.mxu0 %v65
    %93 = vmatprep.subr.mxu0 0.0
    %94 = vmatpush1.msra.mxu0 %v47
    %95 = vmatprep.subr.mxu0 0.0
    %96 = vmatpush1.msra.mxu0 %v46
    %97 = vmatprep.subr.mxu0 0.0
    %98 = vmatpush1.msra.mxu0 %v45
    %99 = vmatprep.subr.mxu0 0.0
    %100 = vmatpush2.msra.mxu0 0.0
    %101 = vmatprep.subr.mxu0 0.0
    %102 = vmatpush2.msra.mxu0 0.0
    %103 = vmatprep.subr.mxu0 0.0
    %104 = vmatpush2.msra.mxu0 0.0
    %105 = vmatprep.subr.mxu0 0.0
    %106 = vmatpush2.msra.mxu0 0.0
    %107 = vmatprep.subr.mxu0 0.0
    %108 = vmatpush2.msra.mxu0 0.0
    %109 = vmatprep.subr.mxu0 0.0
    %110 = vmatpush2.msra.mxu0 0.0
    %111 = vmatprep.subr.mxu0 0.0
    %112 = vmatpush2.msra.mxu0 0.0
    %113 = vmatprep.subr.mxu0 0.0
    %114 = vmatpush2.msra.mxu0 0.0
    %115 = vmatprep.subr.mxu0 0.0
    %116 = vmatpush2.msra.mxu0 0.0
    %117 = vmatprep.subr.mxu0 0.0
    %118 = vmatpush2.msra.mxu0 0.0
    %119 = vmatprep.subr.mxu0 0.0
    %120 = vmatpush2.msra.mxu0 0.0
    %121 = vmatprep.subr.mxu0 0.0
    %122 = vmatpush2.msra.mxu0 0.0
    %123 = vmatprep.subr.mxu0 0.0
    %124 = vmatpush2.msra.mxu0 0.0
    %125 = vmatprep.subr.mxu0 0.0
    %126 = vmatpush2.msra.mxu0 0.0
    %127 = vmatprep.subr.mxu0 0.0
    %128 = vmatpush2.msra.mxu0 0.0
    %129 = vmatprep.subr.mxu0 0.0
    %130 = vmatpush2.msra.mxu0 0.0
    %131 = vmatprep.mubr.f32.mxu0 0.0
    %132 = vmatmul.mubr.f32.gmra.mxu0 %v58
    %v133 = vpop.f32.mrf.mxu0
    %v134 = vadd.f32 %v54, %v133
    %v135 = vpop.f32.mrf.mxu0
    %136 = vmatprep.mubr.f32.mxu0 0.0
    %137 = vmatmul.mubr.f32.gmra.mxu0 %v61
    %v138 = vpop.f32.mrf.mxu0
    %v139 = vadd.f32 %v54, %v138
    %v140 = vpop.f32.mrf.mxu0
    %141 = vdwg.mxu0
    %142 = vst [vmem:[#allocation7] sm:$0xff] %v134
    %143 = vst [vmem:[#allocation7 + $0x8] sm:$0xff] %v139
    // Predicated region
    $region22: #{tpu_custom_call.1} parent=1 // pred_check
      _
    $region23: #{tpu_custom_call.1} parent=1 // pred_check_branch
      %145 = sbr.rel (0) target = $region25
    $region24: #{tpu_custom_call.1} parent=1 // pred_region
      %s147 = ssub.s32 256, 256
      %148 = vsyncadd [#allocation4], %s147
      %s149 = sshll.u32 [#allocation7], 4
      %s150 = int_to_ptr.vmem [resolvable:$true] %s149
      %155 = dma.vmem_to_hbm [thread:$0]  %s150, 256, %s3, [#allocation4], 128, 128, 8
    $region25: #{tpu_custom_call.1} parent=1 // pred_fallthru
      _
    // Predicated region
    $region26: #{tpu_custom_call.1} parent=1 // pred_check
      _
    $region27: #{tpu_custom_call.1} parent=1 // pred_check_branch
      %157 = sbr.rel (0) target = $region29
    $region28: #{tpu_custom_call.1} parent=1 // pred_region
      %158 = dma.done [#allocation4], 256
    $region29: #{tpu_custom_call.1} parent=1 // pred_fallthru
      _
    %159 = vsyncpa [#allocation3], 1
    %160 = vsyncpa [#allocation6], 1
    %161 = vsyncpa [#allocation4], 1

</llo_original>
